<compile_context>
chip_gen: v7x
topology: tpu7x:2x2x1
jax: 0.10.0
libtpu: 0.0.40
codegen_flags: <defaults>
</compile_context>

<pallas_src>
import functools
import math

import jax
import jax.numpy as jnp
from jax.experimental import pallas as pl
from jax.experimental.pallas import tpu as pltpu

_VMEM_LIMIT = 32 * 1024 * 1024  # safe scoped-VMEM budget on v5e/v6e/v7x


def _pick_tile(dim, target):
    """Largest tile <= target that evenly divides dim (full dim if small)."""
    if dim <= target:
        return dim
    if dim % target == 0:
        return target
    for t in range(target, 0, -1):
        if dim % t == 0:
            return t
    return dim


# ----------------------------- tiled matmul + bias -----------------------------

def _matmul_bias_kernel(x_ref, w_ref, b_ref, o_ref, acc_ref):
    k = pl.program_id(2)

    @pl.when(k == 0)
    def _():
        acc_ref[...] = jnp.zeros_like(acc_ref)

    acc_ref[...] += jnp.dot(x_ref[...], w_ref[...],
                            preferred_element_type=jnp.float32)

    @pl.when(k == pl.num_programs(2) - 1)
    def _():
        o_ref[...] = (acc_ref[...] + b_ref[...]).astype(o_ref.dtype)


def matmul_bias(x, w, b, *, out_dtype, tm=256, tn=256, tk=512):
    """(M, K) @ (K, N) + b  with bf16 inputs and f32 accumulation."""
    M, K = x.shape
    K2, N = w.shape
    assert K == K2
    tm = _pick_tile(M, tm)
    tn = _pick_tile(N, tn)
    tk = _pick_tile(K, tk)
    b2 = b.reshape(1, N).astype(jnp.float32)  # bias added in f32 after accumulation

    return pl.pallas_call(
        _matmul_bias_kernel,
        out_shape=jax.ShapeDtypeStruct((M, N), out_dtype),
        grid_spec=pltpu.PrefetchScalarGridSpec(
            num_scalar_prefetch=0,
            grid=(M // tm, N // tn, K // tk),
            in_specs=[
                pl.BlockSpec((tm, tk), lambda i, j, k: (i, k)),
                pl.BlockSpec((tk, tn), lambda i, j, k: (k, j)),
                pl.BlockSpec((1, tn), lambda i, j, k: (0, j)),
            ],
            out_specs=pl.BlockSpec((tm, tn), lambda i, j, k: (i, j)),
            scratch_shapes=[pltpu.VMEM((tm, tn), jnp.float32)],
        ),
        compiler_params=pltpu.CompilerParams(
            dimension_semantics=("parallel", "parallel", "arbitrary"),
            vmem_limit_bytes=_VMEM_LIMIT,
        ),
    )(x, w, b2)


# ----------------------------- flash attention (non-causal) -----------------------------

def _flash_attn_kernel(scale, q_ref, k_ref, v_ref, o_ref, m_sc, l_sc, acc_sc):
    ki = pl.program_id(2)

    @pl.when(ki == 0)
    def _():
        m_sc[...] = jnp.full_like(m_sc, -jnp.inf)
        l_sc[...] = jnp.zeros_like(l_sc)
        acc_sc[...] = jnp.zeros_like(acc_sc)

    q = q_ref[...]                                   # (tq, hd) bf16
    k = k_ref[...]                                   # (tkv, hd) bf16
    s = jax.lax.dot_general(q, k, (((1,), (1,)), ((), ())),
                            preferred_element_type=jnp.float32) * scale  # (tq, tkv) f32

    m_prev = m_sc[...]
    m_new = jnp.maximum(m_prev, jnp.max(s, axis=-1, keepdims=True))
    alpha = jnp.exp(m_prev - m_new)
    p = jnp.exp(s - m_new)
    l_sc[...] = alpha * l_sc[...] + jnp.sum(p, axis=-1, keepdims=True)
    acc_sc[...] = alpha * acc_sc[...] + jnp.dot(p.astype(v_ref.dtype), v_ref[...],
                                                preferred_element_type=jnp.float32)
    m_sc[...] = m_new

    @pl.when(ki == pl.num_programs(2) - 1)
    def _():
        inv_l = pl.reciprocal(l_sc[...], approx=True)
        o_ref[...] = (acc_sc[...] * inv_l).astype(o_ref.dtype)


def flash_attention(q, k, v, *, tq=256, tkv=256):
    """Non-causal softmax(q k^T / sqrt(hd)) v, streamed over KV tiles.

    q, k, v: (B*H, T, hd) bf16.  Returns (B*H, T, hd) in q.dtype.
    """
    BH, T, hd = q.shape
    tq = _pick_tile(T, tq)
    tkv = _pick_tile(T, tkv)
    scale = 1.0 / math.sqrt(hd)

    return pl.pallas_call(
        functools.partial(_flash_attn_kernel, scale),
        out_shape=jax.ShapeDtypeStruct((BH, T, hd), q.dtype),
        grid_spec=pltpu.PrefetchScalarGridSpec(
            num_scalar_prefetch=0,
            grid=(BH, T // tq, T // tkv),
            in_specs=[
                pl.BlockSpec((None, tq, hd), lambda b, qi, ki: (b, qi, 0)),
                pl.BlockSpec((None, tkv, hd), lambda b, qi, ki: (b, ki, 0)),
                pl.BlockSpec((None, tkv, hd), lambda b, qi, ki: (b, ki, 0)),
            ],
            out_specs=pl.BlockSpec((None, tq, hd), lambda b, qi, ki: (b, qi, 0)),
            scratch_shapes=[
                pltpu.VMEM((tq, 1), jnp.float32),    # running max m
                pltpu.VMEM((tq, 1), jnp.float32),    # running denom l
                pltpu.VMEM((tq, hd), jnp.float32),   # output accumulator
            ],
        ),
        compiler_params=pltpu.CompilerParams(
            dimension_semantics=("parallel", "parallel", "arbitrary"),
            vmem_limit_bytes=_VMEM_LIMIT,
        ),
    )(q, k, v)


# ----------------------------- module forward -----------------------------

def non_causal_self_attention(x, w_attn, b_attn, w_proj, b_proj, *, n_head,
                              tq=256, tkv=256):
    """Forward of NonCausalSelfAttention.

    x: (B, T, C) f32.  Weights stored as (in, out) so x @ W matches PyTorch's
    x @ W_pt.T.  Dropout p=0 at inference -> identity.
    """
    B, T, C = x.shape
    assert C % n_head == 0
    hd = C // n_head

    # --- c_attn: (B*T, C) @ (C, 3C) + b, bf16 MXU / f32 accumulation ---
    x2 = x.reshape(B * T, C).astype(jnp.bfloat16)
    qkv = matmul_bias(x2, w_attn.astype(jnp.bfloat16), b_attn,
                      out_dtype=jnp.bfloat16)                    # (B*T, 3C)

    # --- head split (glue reshapes/transposes in plain JAX) ---
    qkv = qkv.reshape(B, T, 3, n_head, hd)
    q = qkv[:, :, 0].transpose(0, 2, 1, 3).reshape(B * n_head, T, hd)
    k = qkv[:, :, 1].transpose(0, 2, 1, 3).reshape(B * n_head, T, hd)
    v = qkv[:, :, 2].transpose(0, 2, 1, 3).reshape(B * n_head, T, hd)

    # --- flash attention (non-causal) ---
    y = flash_attention(q, k, v, tq=tq, tkv=tkv)                 # (B*H, T, hd) bf16

    # --- head merge + c_proj: (B*T, C) @ (C, C) + b ---
    y = y.reshape(B, n_head, T, hd).transpose(0, 2, 1, 3).reshape(B * T, C)
    out = matmul_bias(y, w_proj.astype(jnp.bfloat16), b_proj,
                      out_dtype=x.dtype)                         # (B*T, C) f32

    # attn_dropout / resid_dropout with p=0 (inference) are identity.
    # TODO(synk): training-mode dropout (p > 0) not implemented.
    return out.reshape(B, T, C)


# ----------------------------- pure-JAX reference -----------------------------

def _reference_attention(x, w_attn, b_attn, w_proj, b_proj, n_head):
    B, T, C = x.shape
    hd = C // n_head
    qkv = x @ w_attn + b_attn
    q, k, v = jnp.split(qkv, 3, axis=-1)

    def heads(t):
        return t.reshape(B, T, n_head, hd).transpose(0, 2, 1, 3)

    q, k, v = heads(q), heads(k), heads(v)
    att = jnp.einsum('bhtd,bhsd->bhts', q, k) / math.sqrt(hd)
    att = jax.nn.softmax(att, axis=-1)
    y = jnp.einsum('bhts,bhsd->bhtd', att, v)
    y = y.transpose(0, 2, 1, 3).reshape(B, T, C)
    return y @ w_proj + b_proj


# ----------------------------- main -----------------------------

if __name__ == "__main__":
    B, T, C, n_head = 2, 8, 32, 2

    key = jax.random.PRNGKey(0)
    kx, kw1, kb1, kw2, kb2 = jax.random.split(key, 5)
    x = jax.random.normal(kx, (B, T, C), jnp.float32)
    w_attn = 0.02 * jax.random.normal(kw1, (C, 3 * C), jnp.float32)
    b_attn = 0.02 * jax.random.normal(kb1, (3 * C,), jnp.float32)
    w_proj = 0.02 * jax.random.normal(kw2, (C, C), jnp.float32)
    b_proj = 0.02 * jax.random.normal(kb2, (C,), jnp.float32)

    fwd = jax.jit(functools.partial(non_causal_self_attention, n_head=n_head))
    y = fwd(x, w_attn, b_attn, w_proj, b_proj)
    y = jax.block_until_ready(y)

    y_ref = _reference_attention(x, w_attn, b_attn, w_proj, b_proj, n_head)

    assert y.shape == (B, T, C)
    assert bool(jnp.all(jnp.isfinite(y)))
    max_err = float(jnp.max(jnp.abs(y - y_ref)))
    assert max_err < 2e-2, f"max abs err {max_err}"
    print("KERNEL_OK")
</pallas_src>

<mosaic_0001>
module attributes {stable_mosaic.version = 11 : i64} {
  func.func @_matmul_bias_kernel(%arg0: i32, %arg1: i32, %arg2: i32, %arg3: memref<16x32xbf16, #tpu.memory_space<vmem>>, %arg4: memref<32x96xbf16, #tpu.memory_space<vmem>>, %arg5: memref<1x96xf32, #tpu.memory_space<vmem>>, %arg6: memref<16x96xbf16, #tpu.memory_space<vmem>>, %arg7: memref<16x96xf32, #tpu.memory_space<vmem>>) attributes {dimension_semantics = [#tpu.dimension_semantics<parallel>, #tpu.dimension_semantics<parallel>, #tpu.dimension_semantics<arbitrary>], iteration_bounds = array<i64: 1, 1, 1>, scalar_prefetch = 0 : i64, scratch_operands = 1 : i64, tpu.core_type = #tpu.core_type<tc>, window_params = [{transform_indices = @transform_0, window_bounds = array<i64: 16, 32>}, {transform_indices = @transform_1, window_bounds = array<i64: 32, 96>}, {transform_indices = @transform_2, window_bounds = array<i64: 1, 96>}, {transform_indices = @transform_3, window_bounds = array<i64: 16, 96>}]} {
    %c0_i32 = arith.constant 0 : i32
    %0 = arith.cmpi eq, %arg2, %c0_i32 : i32
    %1 = arith.extui %0 : i1 to i32
    %c0_i32_0 = arith.constant 0 : i32
    %2 = arith.cmpi ne, %1, %c0_i32_0 : i32
    scf.if %2 {
      %cst_10 = arith.constant 0.000000e+00 : f32
      %12 = vector.broadcast %cst_10 : f32 to vector<16x96xf32>
      %c0_11 = arith.constant 0 : index
      %c0_12 = arith.constant 0 : index
      %13 = vector.load %arg7[%c0_11, %c0_12] : memref<16x96xf32, #tpu.memory_space<vmem>>, vector<16x96xf32>
      tpu.vector_store %arg7[%c0_11, %c0_12], %12 {strides = array<i32>} : memref<16x96xf32, #tpu.memory_space<vmem>>, vector<16x96xf32>,
    } else {
    }
    %c0 = arith.constant 0 : index
    %c0_1 = arith.constant 0 : index
    %3 = vector.load %arg7[%c0, %c0_1] : memref<16x96xf32, #tpu.memory_space<vmem>>, vector<16x96xf32>
    %c0_2 = arith.constant 0 : index
    %c0_3 = arith.constant 0 : index
    %4 = vector.load %arg3[%c0_2, %c0_3] : memref<16x32xbf16, #tpu.memory_space<vmem>>, vector<16x32xbf16>
    %c0_4 = arith.constant 0 : index
    %c0_5 = arith.constant 0 : index
    %5 = vector.load %arg4[%c0_4, %c0_5] : memref<32x96xbf16, #tpu.memory_space<vmem>>, vector<32x96xbf16>
    %cst = arith.constant dense<0.000000e+00> : vector<16x96xf32>
    %6 = tpu.matmul %4, %5, %cst {dimension_numbers = #tpu.dot_dimension_numbers<[1], [0], [0], [1], [0, 0, 1, 1], [], []>} : vector<16x32xbf16>, vector<32x96xbf16>, vector<16x96xf32> -> vector<16x96xf32>
    %7 = arith.addf %3, %6 : vector<16x96xf32>
    %c0_6 = arith.constant 0 : index
    %c0_7 = arith.constant 0 : index
    %8 = vector.load %arg7[%c0_6, %c0_7] : memref<16x96xf32, #tpu.memory_space<vmem>>, vector<16x96xf32>
    tpu.vector_store %arg7[%c0_6, %c0_7], %7 {strides = array<i32>} : memref<16x96xf32, #tpu.memory_space<vmem>>, vector<16x96xf32>,
    %c0_i32_8 = arith.constant 0 : i32
    %9 = arith.cmpi eq, %arg2, %c0_i32_8 : i32
    %10 = arith.extui %9 : i1 to i32
    %c0_i32_9 = arith.constant 0 : i32
    %11 = arith.cmpi ne, %10, %c0_i32_9 : i32
    scf.if %11 {
      %c0_10 = arith.constant 0 : index
      %c0_11 = arith.constant 0 : index
      %12 = vector.load %arg7[%c0_10, %c0_11] : memref<16x96xf32, #tpu.memory_space<vmem>>, vector<16x96xf32>
      %c0_12 = arith.constant 0 : index
      %c0_13 = arith.constant 0 : index
      %13 = vector.load %arg5[%c0_12, %c0_13] : memref<1x96xf32, #tpu.memory_space<vmem>>, vector<1x96xf32>
      %14 = vector.broadcast %13 : vector<1x96xf32> to vector<16x96xf32>
      %15 = arith.addf %12, %14 : vector<16x96xf32>
      %16 = arith.truncf %15 : vector<16x96xf32> to vector<16x96xbf16>
      %c0_14 = arith.constant 0 : index
      %c0_15 = arith.constant 0 : index
      %17 = vector.load %arg6[%c0_14, %c0_15] : memref<16x96xbf16, #tpu.memory_space<vmem>>, vector<16x96xbf16>
      tpu.vector_store %arg6[%c0_14, %c0_15], %16 {strides = array<i32>} : memref<16x96xbf16, #tpu.memory_space<vmem>>, vector<16x96xbf16>,
    } else {
    }
    return
  }
  func.func @transform_0(%arg0: i32, %arg1: i32, %arg2: i32) -> (i32, i32) {
    %c0_i32 = arith.constant 0 : i32
    return %arg0, %arg2 : i32, i32
  }
  func.func @transform_1(%arg0: i32, %arg1: i32, %arg2: i32) -> (i32, i32) {
    %c0_i32 = arith.constant 0 : i32
    return %arg2, %arg1 : i32, i32
  }
  func.func @transform_2(%arg0: i32, %arg1: i32, %arg2: i32) -> (i32, i32) {
    %c0_i32 = arith.constant 0 : i32
    %c0_i32_0 = arith.constant 0 : i32
    return %c0_i32, %arg1 : i32, i32
  }
  func.func @transform_3(%arg0: i32, %arg1: i32, %arg2: i32) -> (i32, i32) {
    %c0_i32 = arith.constant 0 : i32
    return %arg0, %arg1 : i32, i32
  }
}

module attributes {stable_mosaic.version = 11 : i64} {
  func.func @_matmul_bias_kernel(%arg0: i32, %arg1: i32, %arg2: i32, %arg3: memref<16x32xbf16, #tpu.memory_space<vmem>>, %arg4: memref<32x32xbf16, #tpu.memory_space<vmem>>, %arg5: memref<1x32xf32, #tpu.memory_space<vmem>>, %arg6: memref<16x32xf32, #tpu.memory_space<vmem>>, %arg7: memref<16x32xf32, #tpu.memory_space<vmem>>) attributes {dimension_semantics = [#tpu.dimension_semantics<parallel>, #tpu.dimension_semantics<parallel>, #tpu.dimension_semantics<arbitrary>], iteration_bounds = array<i64: 1, 1, 1>, scalar_prefetch = 0 : i64, scratch_operands = 1 : i64, tpu.core_type = #tpu.core_type<tc>, window_params = [{transform_indices = @transform_0, window_bounds = array<i64: 16, 32>}, {transform_indices = @transform_1, window_bounds = array<i64: 32, 32>}, {transform_indices = @transform_2, window_bounds = array<i64: 1, 32>}, {transform_indices = @transform_3, window_bounds = array<i64: 16, 32>}]} {
    %c0_i32 = arith.constant 0 : i32
    %0 = arith.cmpi eq, %arg2, %c0_i32 : i32
    %1 = arith.extui %0 : i1 to i32
    %c0_i32_0 = arith.constant 0 : i32
    %2 = arith.cmpi ne, %1, %c0_i32_0 : i32
    scf.if %2 {
      %cst_10 = arith.constant 0.000000e+00 : f32
      %12 = vector.broadcast %cst_10 : f32 to vector<16x32xf32>
      %c0_11 = arith.constant 0 : index
      %c0_12 = arith.constant 0 : index
      %13 = vector.load %arg7[%c0_11, %c0_12] : memref<16x32xf32, #tpu.memory_space<vmem>>, vector<16x32xf32>
      tpu.vector_store %arg7[%c0_11, %c0_12], %12 {strides = array<i32>} : memref<16x32xf32, #tpu.memory_space<vmem>>, vector<16x32xf32>,
    } else {
    }
    %c0 = arith.constant 0 : index
    %c0_1 = arith.constant 0 : index
    %3 = vector.load %arg7[%c0, %c0_1] : memref<16x32xf32, #tpu.memory_space<vmem>>, vector<16x32xf32>
    %c0_2 = arith.constant 0 : index
    %c0_3 = arith.constant 0 : index
    %4 = vector.load %arg3[%c0_2, %c0_3] : memref<16x32xbf16, #tpu.memory_space<vmem>>, vector<16x32xbf16>
    %c0_4 = arith.constant 0 : index
    %c0_5 = arith.constant 0 : index
    %5 = vector.load %arg4[%c0_4, %c0_5] : memref<32x32xbf16, #tpu.memory_space<vmem>>, vector<32x32xbf16>
    %cst = arith.constant dense<0.000000e+00> : vector<16x32xf32>
    %6 = tpu.matmul %4, %5, %cst {dimension_numbers = #tpu.dot_dimension_numbers<[1], [0], [0], [1], [0, 0, 1, 1], [], []>} : vector<16x32xbf16>, vector<32x32xbf16>, vector<16x32xf32> -> vector<16x32xf32>
    %7 = arith.addf %3, %6 : vector<16x32xf32>
    %c0_6 = arith.constant 0 : index
    %c0_7 = arith.constant 0 : index
    %8 = vector.load %arg7[%c0_6, %c0_7] : memref<16x32xf32, #tpu.memory_space<vmem>>, vector<16x32xf32>
    tpu.vector_store %arg7[%c0_6, %c0_7], %7 {strides = array<i32>} : memref<16x32xf32, #tpu.memory_space<vmem>>, vector<16x32xf32>,
    %c0_i32_8 = arith.constant 0 : i32
    %9 = arith.cmpi eq, %arg2, %c0_i32_8 : i32
    %10 = arith.extui %9 : i1 to i32
    %c0_i32_9 = arith.constant 0 : i32
    %11 = arith.cmpi ne, %10, %c0_i32_9 : i32
    scf.if %11 {
      %c0_10 = arith.constant 0 : index
      %c0_11 = arith.constant 0 : index
      %12 = vector.load %arg7[%c0_10, %c0_11] : memref<16x32xf32, #tpu.memory_space<vmem>>, vector<16x32xf32>
      %c0_12 = arith.constant 0 : index
      %c0_13 = arith.constant 0 : index
      %13 = vector.load %arg5[%c0_12, %c0_13] : memref<1x32xf32, #tpu.memory_space<vmem>>, vector<1x32xf32>
      %14 = vector.broadcast %13 : vector<1x32xf32> to vector<16x32xf32>
      %15 = arith.addf %12, %14 : vector<16x32xf32>
      %c0_14 = arith.constant 0 : index
      %c0_15 = arith.constant 0 : index
      %16 = vector.load %arg6[%c0_14, %c0_15] : memref<16x32xf32, #tpu.memory_space<vmem>>, vector<16x32xf32>
      tpu.vector_store %arg6[%c0_14, %c0_15], %15 {strides = array<i32>} : memref<16x32xf32, #tpu.memory_space<vmem>>, vector<16x32xf32>,
    } else {
    }
    return
  }
  func.func @transform_0(%arg0: i32, %arg1: i32, %arg2: i32) -> (i32, i32) {
    %c0_i32 = arith.constant 0 : i32
    return %arg0, %arg2 : i32, i32
  }
  func.func @transform_1(%arg0: i32, %arg1: i32, %arg2: i32) -> (i32, i32) {
    %c0_i32 = arith.constant 0 : i32
    return %arg2, %arg1 : i32, i32
  }
  func.func @transform_2(%arg0: i32, %arg1: i32, %arg2: i32) -> (i32, i32) {
    %c0_i32 = arith.constant 0 : i32
    %c0_i32_0 = arith.constant 0 : i32
    return %c0_i32, %arg1 : i32, i32
  }
  func.func @transform_3(%arg0: i32, %arg1: i32, %arg2: i32) -> (i32, i32) {
    %c0_i32 = arith.constant 0 : i32
    return %arg0, %arg1 : i32, i32
  }
}

module attributes {stable_mosaic.version = 11 : i64} {
  func.func @_flash_attn_kernel(%arg0: i32, %arg1: i32, %arg2: i32, %arg3: memref<1x8x16xbf16, #tpu.memory_space<vmem>>, %arg4: memref<1x8x16xbf16, #tpu.memory_space<vmem>>, %arg5: memref<1x8x16xbf16, #tpu.memory_space<vmem>>, %arg6: memref<1x8x16xbf16, #tpu.memory_space<vmem>>, %arg7: memref<8x1xf32, #tpu.memory_space<vmem>>, %arg8: memref<8x1xf32, #tpu.memory_space<vmem>>, %arg9: memref<8x16xf32, #tpu.memory_space<vmem>>) attributes {dimension_semantics = [#tpu.dimension_semantics<parallel>, #tpu.dimension_semantics<parallel>, #tpu.dimension_semantics<arbitrary>], iteration_bounds = array<i64: 4, 1, 1>, scalar_prefetch = 0 : i64, scratch_operands = 3 : i64, tpu.core_type = #tpu.core_type<tc>, window_params = [{transform_indices = @transform_0, window_bounds = array<i64: 1, 8, 16>}, {transform_indices = @transform_1, window_bounds = array<i64: 1, 8, 16>}, {transform_indices = @transform_2, window_bounds = array<i64: 1, 8, 16>}, {transform_indices = @transform_3, window_bounds = array<i64: 1, 8, 16>}]} {
    %c0_i32 = arith.constant 0 : i32
    %0 = arith.cmpi eq, %arg2, %c0_i32 : i32
    %1 = arith.extui %0 : i1 to i32
    %c0_i32_0 = arith.constant 0 : i32
    %2 = arith.cmpi ne, %1, %c0_i32_0 : i32
    scf.if %2 {
      %cst_27 = arith.constant 0xFF800000 : f32
      %38 = vector.broadcast %cst_27 : f32 to vector<8x1xf32>
      %c0_28 = arith.constant 0 : index
      %c0_29 = arith.constant 0 : index
      %39 = vector.load %arg7[%c0_28, %c0_29] : memref<8x1xf32, #tpu.memory_space<vmem>>, vector<8x1xf32>
      tpu.vector_store %arg7[%c0_28, %c0_29], %38 {strides = array<i32>} : memref<8x1xf32, #tpu.memory_space<vmem>>, vector<8x1xf32>,
      %cst_30 = arith.constant 0.000000e+00 : f32
      %40 = vector.broadcast %cst_30 : f32 to vector<8x1xf32>
      %c0_31 = arith.constant 0 : index
      %c0_32 = arith.constant 0 : index
      %41 = vector.load %arg8[%c0_31, %c0_32] : memref<8x1xf32, #tpu.memory_space<vmem>>, vector<8x1xf32>
      tpu.vector_store %arg8[%c0_31, %c0_32], %40 {strides = array<i32>} : memref<8x1xf32, #tpu.memory_space<vmem>>, vector<8x1xf32>,
      %cst_33 = arith.constant 0.000000e+00 : f32
      %42 = vector.broadcast %cst_33 : f32 to vector<8x16xf32>
      %c0_34 = arith.constant 0 : index
      %c0_35 = arith.constant 0 : index
      %43 = vector.load %arg9[%c0_34, %c0_35] : memref<8x16xf32, #tpu.memory_space<vmem>>, vector<8x16xf32>
      tpu.vector_store %arg9[%c0_34, %c0_35], %42 {strides = array<i32>} : memref<8x16xf32, #tpu.memory_space<vmem>>, vector<8x16xf32>,
    } else {
    }
    %c0 = arith.constant 0 : index
    %c0_1 = arith.constant 0 : index
    %c0_2 = arith.constant 0 : index
    %3 = vector.load %arg3[%c0, %c0_1, %c0_2] : memref<1x8x16xbf16, #tpu.memory_space<vmem>>, vector<1x8x16xbf16>
    %4 = vector.shape_cast %3 : vector<1x8x16xbf16> to vector<8x16xbf16>
    %c0_3 = arith.constant 0 : index
    %c0_4 = arith.constant 0 : index
    %c0_5 = arith.constant 0 : index
    %5 = vector.load %arg4[%c0_3, %c0_4, %c0_5] : memref<1x8x16xbf16, #tpu.memory_space<vmem>>, vector<1x8x16xbf16>
    %6 = vector.shape_cast %5 : vector<1x8x16xbf16> to vector<8x16xbf16>
    %cst = arith.constant dense<0.000000e+00> : vector<8x8xf32>
    %7 = tpu.matmul %4, %6, %cst {dimension_numbers = #tpu.dot_dimension_numbers<[1], [1], [0], [0], [0, 0, 1, 0], [], []>} : vector<8x16xbf16>, vector<8x16xbf16>, vector<8x8xf32> -> vector<8x8xf32>
    %cst_6 = arith.constant 2.500000e-01 : f32
    %8 = vector.broadcast %cst_6 : f32 to vector<8x8xf32>
    %9 = arith.mulf %7, %8 : vector<8x8xf32>
    %c0_7 = arith.constant 0 : index
    %c0_8 = arith.constant 0 : index
    %10 = vector.load %arg7[%c0_7, %c0_8] : memref<8x1xf32, #tpu.memory_space<vmem>>, vector<8x1xf32>
    %cst_9 = arith.constant dense<0xFF800000> : vector<8xf32>
    %11 = vector.multi_reduction <maximumf>, %9, %cst_9 [1] : vector<8x8xf32> to vector<8xf32>
    %12 = vector.shape_cast %11 : vector<8xf32> to vector<8x1xf32>
    %13 = arith.maximumf %10, %12 : vector<8x1xf32>
    %14 = arith.subf %10, %13 : vector<8x1xf32>
    %15 = math.exp %14 : vector<8x1xf32>
    %16 = vector.broadcast %13 : vector<8x1xf32> to vector<8x8xf32>
    %17 = arith.subf %9, %16 : vector<8x8xf32>
    %18 = math.exp %17 : vector<8x8xf32>
    %c0_10 = arith.constant 0 : index
    %c0_11 = arith.constant 0 : index
    %19 = vector.load %arg8[%c0_10, %c0_11] : memref<8x1xf32, #tpu.memory_space<vmem>>, vector<8x1xf32>
    %20 = arith.mulf %15, %19 : vector<8x1xf32>
    %cst_12 = arith.constant dense<0.000000e+00> : vector<8xf32>
    %21 = vector.multi_reduction <add>, %18, %cst_12 [1] : vector<8x8xf32> to vector<8xf32>
    %22 = vector.shape_cast %21 : vector<8xf32> to vector<8x1xf32>
    %23 = arith.addf %20, %22 : vector<8x1xf32>
    %c0_13 = arith.constant 0 : index
    %c0_14 = arith.constant 0 : index
    %24 = vector.load %arg8[%c0_13, %c0_14] : memref<8x1xf32, #tpu.memory_space<vmem>>, vector<8x1xf32>
    tpu.vector_store %arg8[%c0_13, %c0_14], %23 {strides = array<i32>} : memref<8x1xf32, #tpu.memory_space<vmem>>, vector<8x1xf32>,
    %c0_15 = arith.constant 0 : index
    %c0_16 = arith.constant 0 : index
    %25 = vector.load %arg9[%c0_15, %c0_16] : memref<8x16xf32, #tpu.memory_space<vmem>>, vector<8x16xf32>
    %26 = vector.broadcast %15 : vector<8x1xf32> to vector<8x16xf32>
    %27 = arith.mulf %26, %25 : vector<8x16xf32>
    %28 = arith.truncf %18 : vector<8x8xf32> to vector<8x8xbf16>
    %c0_17 = arith.constant 0 : index
    %c0_18 = arith.constant 0 : index
    %c0_19 = arith.constant 0 : index
    %29 = vector.load %arg5[%c0_17, %c0_18, %c0_19] : memref<1x8x16xbf16, #tpu.memory_space<vmem>>, vector<1x8x16xbf16>
    %30 = vector.shape_cast %29 : vector<1x8x16xbf16> to vector<8x16xbf16>
    %cst_20 = arith.constant dense<0.000000e+00> : vector<8x16xf32>
    %31 = tpu.matmul %28, %30, %cst_20 {dimension_numbers = #tpu.dot_dimension_numbers<[1], [0], [0], [1], [0, 0, 1, 1], [], []>} : vector<8x8xbf16>, vector<8x16xbf16>, vector<8x16xf32> -> vector<8x16xf32>
    %32 = arith.addf %27, %31 : vector<8x16xf32>
    %c0_21 = arith.constant 0 : index
    %c0_22 = arith.constant 0 : index
    %33 = vector.load %arg9[%c0_21, %c0_22] : memref<8x16xf32, #tpu.memory_space<vmem>>, vector<8x16xf32>
    tpu.vector_store %arg9[%c0_21, %c0_22], %32 {strides = array<i32>} : memref<8x16xf32, #tpu.memory_space<vmem>>, vector<8x16xf32>,
    %c0_23 = arith.constant 0 : index
    %c0_24 = arith.constant 0 : index
    %34 = vector.load %arg7[%c0_23, %c0_24] : memref<8x1xf32, #tpu.memory_space<vmem>>, vector<8x1xf32>
    tpu.vector_store %arg7[%c0_23, %c0_24], %13 {strides = array<i32>} : memref<8x1xf32, #tpu.memory_space<vmem>>, vector<8x1xf32>,
    %c0_i32_25 = arith.constant 0 : i32
    %35 = arith.cmpi eq, %arg2, %c0_i32_25 : i32
    %36 = arith.extui %35 : i1 to i32
    %c0_i32_26 = arith.constant 0 : i32
    %37 = arith.cmpi ne, %36, %c0_i32_26 : i32
    scf.if %37 {
      %c0_27 = arith.constant 0 : index
      %c0_28 = arith.constant 0 : index
      %38 = vector.load %arg8[%c0_27, %c0_28] : memref<8x1xf32, #tpu.memory_space<vmem>>, vector<8x1xf32>
      %39 = tpu.reciprocal %38 {approx = true} : vector<8x1xf32> -> vector<8x1xf32>
      %c0_29 = arith.constant 0 : index
      %c0_30 = arith.constant 0 : index
      %40 = vector.load %arg9[%c0_29, %c0_30] : memref<8x16xf32, #tpu.memory_space<vmem>>, vector<8x16xf32>
      %41 = vector.broadcast %39 : vector<8x1xf32> to vector<8x16xf32>
      %42 = arith.mulf %40, %41 : vector<8x16xf32>
      %43 = arith.truncf %42 : vector<8x16xf32> to vector<8x16xbf16>
      %c0_31 = arith.constant 0 : index
      %c0_32 = arith.constant 0 : index
      %c0_33 = arith.constant 0 : index
      %44 = vector.load %arg6[%c0_31, %c0_32, %c0_33] : memref<1x8x16xbf16, #tpu.memory_space<vmem>>, vector<1x8x16xbf16>
      %45 = vector.shape_cast %44 : vector<1x8x16xbf16> to vector<8x16xbf16>
      %46 = vector.shape_cast %43 : vector<8x16xbf16> to vector<1x8x16xbf16>
      tpu.vector_store %arg6[%c0_31, %c0_32, %c0_33], %46 {strides = array<i32>} : memref<1x8x16xbf16, #tpu.memory_space<vmem>>, vector<1x8x16xbf16>,
    } else {
    }
    return
  }
  func.func @transform_0(%arg0: i32, %arg1: i32, %arg2: i32) -> (i32, i32, i32) {
    %c0_i32 = arith.constant 0 : i32
    %c0_i32_0 = arith.constant 0 : i32
    return %arg0, %arg1, %c0_i32 : i32, i32, i32
  }
  func.func @transform_1(%arg0: i32, %arg1: i32, %arg2: i32) -> (i32, i32, i32) {
    %c0_i32 = arith.constant 0 : i32
    %c0_i32_0 = arith.constant 0 : i32
    return %arg0, %arg2, %c0_i32 : i32, i32, i32
  }
  func.func @transform_2(%arg0: i32, %arg1: i32, %arg2: i32) -> (i32, i32, i32) {
    %c0_i32 = arith.constant 0 : i32
    %c0_i32_0 = arith.constant 0 : i32
    return %arg0, %arg2, %c0_i32 : i32, i32, i32
  }
  func.func @transform_3(%arg0: i32, %arg1: i32, %arg2: i32) -> (i32, i32, i32) {
    %c0_i32 = arith.constant 0 : i32
    %c0_i32_0 = arith.constant 0 : i32
    return %arg0, %arg1, %c0_i32 : i32, i32, i32
  }
}

</mosaic_0001>

<llo_original>
// kernel: non_causal_self_attention.3
$region0: #{non_causal_self_attention.3}
  #allocation0 [shape = 'u32[]', space=smem, size = 0x4, offset = 0x4, fixed_abs, tag = 'smem constant byte address 0x4 - core index']
  #allocation1 [shape = 'u32[144,128]{1,0:T(1,128)}', space=vmem, size = 0x12000, scoped, tag = 'internal scratch']
  #allocation2 [shape = 'f32[16,96]{1,0:T(8,128)}', space=vmem, size = 0x2000, scoped, tag = 'scratch operand']
  %s0 = inlined_call_operand.vmem [shape: bf16[16,32], index: 0, kind: input, shape index: {}]
  %s1 = inlined_call_operand.vmem [shape: bf16[32,96], index: 1, kind: input, shape index: {}]
  %s2 = inlined_call_operand.vmem [shape: f32[1,96], index: 2, kind: input, shape index: {}]
  %s3 = inlined_call_operand.vmem [shape: bf16[16,96], index: 3, kind: output, shape index: {}]
  %s4 = sld [smem:[#allocation0]]
  $region30: #{non_causal_self_attention.3} parent=0
    _
  %s6 = ssub.s32 1, %s4
  %s7 = scalar_select 0, %s6, %s4
  // Predicated region
  $region2: #{non_causal_self_attention.3} parent=0 // pred_check
    _
  $region3: #{non_causal_self_attention.3} parent=0 // pred_check_branch
    %9 = sbr.rel (0) target = $region5
  $region4: #{non_causal_self_attention.3} parent=0 // pred_region
    _
  $region5: #{non_causal_self_attention.3} parent=0 // pred_fallthru
    _
  // Predicated region
  $region6: #{non_causal_self_attention.3} parent=0 // pred_check
    _
  $region7: #{non_causal_self_attention.3} parent=0 // pred_check_branch
    %11 = sbr.rel (0) target = $region9
  $region8: #{non_causal_self_attention.3} parent=0 // pred_region
    _
  $region9: #{non_causal_self_attention.3} parent=0 // pred_fallthru
    _
  // Predicated region
  $region10: #{non_causal_self_attention.3} parent=0 // pred_check
    _
  $region11: #{non_causal_self_attention.3} parent=0 // pred_check_branch
    %13 = sbr.rel (0) target = $region13
  $region12: #{non_causal_self_attention.3} parent=0 // pred_region
    _
  $region13: #{non_causal_self_attention.3} parent=0 // pred_fallthru
    _
  %p15 = scmp.eq.s32.totalorder 0, 0
  // Predicated region
  $region14: #{non_causal_self_attention.3} parent=0 // pred_check
    %p16 = pneg %p15
  $region15: #{non_causal_self_attention.3} parent=0 // pred_check_branch
    %18 = sbr.rel (%p16) target = $region17
  $region16: #{non_causal_self_attention.3} parent=0 // pred_region
    %vm19 = vcmask 785408
    %20 = vst.msk [vmem:[#allocation2] sm:$0xff] %vm19, 0.0
    %21 = vst.msk [vmem:[#allocation2 + $0x8] sm:$0xff] %vm19, 0.0
  $region17: #{non_causal_self_attention.3} parent=0 // pred_fallthru
    _
  %v22 = vld [vmem:[#allocation2] sm:$0xff]
  %v23 = vld [vmem:[#allocation2 + $0x8] sm:$0xff]
  %v24 = vld [vmem:[%s0] sm:$0xf]
  %v25 = vld [vmem:[%s0 + $0x4] sm:$0xf]
  %v26 = vld [vmem:[%s1] sm:$0xf]
  %v27 = vld [vmem:[%s1 + $0x4] sm:$0xf]
  %v28 = vld [vmem:[%s1 + $0x8] sm:$0xf]
  %v29 = vld [vmem:[%s1 + $0xc] sm:$0xf]
  %v32 = vunpack.c.l.b16 %v24
  %v33 = vunpack.c.l.b16 %v25
  %v34 = vpack.c.b16 %v33, %v32
  %v39 = vunpack.c.l.b16 %v26
  %v40 = vunpack.c.l.b16 %v27
  %v41 = vunpack.c.l.b16 %v28
  %v42 = vunpack.c.l.b16 %v29
  %v43 = vpack.c.b16 %v40, %v39
  %v44 = vpack.c.b16 %v42, %v41
  %vm47 = vcmask 261120
  %v49 = vsel %vm47, %v34, 0
  %51 = vmatprep.subr.bf16.mxu0 0
  %52 = vmatpush1.bf16.msra.mxu0 %v43
  %53 = vmatprep.subr.bf16.mxu0 0
  %54 = vmatpush1.bf16.msra.mxu0 %v44
  %55 = vmatprep.subr.bf16.mxu0 0
  %56 = vmatpush1.bf16.msra.mxu0 0
  %57 = vmatprep.subr.bf16.mxu0 0
  %58 = vmatpush1.bf16.msra.mxu0 0
  %59 = vmatprep.subr.bf16.mxu0 0
  %60 = vmatpush1.bf16.msra.mxu0 0
  %61 = vmatprep.subr.bf16.mxu0 0
  %62 = vmatpush1.bf16.msra.mxu0 0
  %63 = vmatprep.subr.bf16.mxu0 0
  %64 = vmatpush1.bf16.msra.mxu0 0
  %65 = vmatprep.subr.bf16.mxu0 0
  %66 = vmatpush1.bf16.msra.mxu0 0
  %67 = vmatprep.subr.bf16.mxu0 0
  %68 = vmatpush1.bf16.msra.mxu0 0
  %69 = vmatprep.subr.bf16.mxu0 0
  %70 = vmatpush1.bf16.msra.mxu0 0
  %71 = vmatprep.subr.bf16.mxu0 0
  %72 = vmatpush1.bf16.msra.mxu0 0
  %73 = vmatprep.subr.bf16.mxu0 0
  %74 = vmatpush1.bf16.msra.mxu0 0
  %75 = vmatprep.subr.bf16.mxu0 0
  %76 = vmatpush1.bf16.msra.mxu0 0
  %77 = vmatprep.subr.bf16.mxu0 0
  %78 = vmatpush1.bf16.msra.mxu0 0
  %79 = vmatprep.subr.bf16.mxu0 0
  %80 = vmatpush1.bf16.msra.mxu0 0
  %81 = vmatprep.subr.bf16.mxu0 0
  %82 = vmatpush1.bf16.msra.mxu0 0
  %83 = vmatprep.mubr.bf16.mxu0 0
  %84 = vmatmul.mubr.bf16.gmra.mrb[0].mxu0 %v49
  %v85 = vpop.f32.mrb[0].mxu0
  %v86 = vadd.f32 0.0, %v85
  %v87 = vpop.f32.mrb[0].mxu0
  %v88 = vpop.f32.mrb[0].mxu0
  %v89 = vadd.f32 0.0, %v88
  %v90 = vpop.f32.mrb[0].mxu0
  %91 = vdwg.mxu0
  %v92 = vadd.f32 %v22, %v86
  %v93 = vadd.f32 %v23, %v89
  %vm94 = vcmask 785408
  %95 = vst.msk [vmem:[#allocation2] sm:$0xff] %vm94, %v92
  %96 = vst.msk [vmem:[#allocation2 + $0x8] sm:$0xff] %vm94, %v93
  // Predicated region
  $region18: #{non_causal_self_attention.3} parent=0 // pred_check
    %p97 = pneg %p15
  $region19: #{non_causal_self_attention.3} parent=0 // pred_check_branch
    %99 = sbr.rel (%p97) target = $region21
  $region20: #{non_causal_self_attention.3} parent=0 // pred_region
    %v100 = vld [vmem:[#allocation2] sm:$0xff]
    %v101 = vld [vmem:[#allocation2 + $0x8] sm:$0xff]
    %v102 = vld [vmem:[%s2] sm:$0x1]
    %v104 = vlaneseq
    %v105 = vshrl.u32 %v104, 7
    %v106 = vsub.s32 0, %v105
    %v107 = vrot.slane %v102, %v106
    %v109 = vadd.f32 %v100, %v107
    %v110 = vadd.f32 %v101, %v107
    %v111 = vpack.c.bf16 %v110, %v109
    %v113 = vunpack.c.l.b16 %v111
    %v114 = vunpack.c.h.b16 %v111
    %v115 = vpack.c.b16 %v113, %v113
    %v116 = vpack.c.b16 %v114, %v114
    %vm119 = vcmask 781312
    %120 = vst.msk [vmem:[%s3] sm:$0xf] %vm119, %v115
    %121 = vst.msk [vmem:[%s3 + $0x4] sm:$0xf] %vm119, %v116
  $region21: #{non_causal_self_attention.3} parent=0 // pred_fallthru
    _
  // Predicated region
  $region22: #{non_causal_self_attention.3} parent=0 // pred_check
    _
  $region23: #{non_causal_self_attention.3} parent=0 // pred_check_branch
    %123 = sbr.rel (0) target = $region25
  $region24: #{non_causal_self_attention.3} parent=0 // pred_region
    _
  $region25: #{non_causal_self_attention.3} parent=0 // pred_fallthru
    _
  // Predicated region
  $region26: #{non_causal_self_attention.3} parent=0 // pred_check
    _
  $region27: #{non_causal_self_attention.3} parent=0 // pred_check_branch
    %125 = sbr.rel (0) target = $region29
  $region28: #{non_causal_self_attention.3} parent=0 // pred_region
    _
  $region29: #{non_causal_self_attention.3} parent=0 // pred_fallthru
    _

// kernel: non_causal_self_attention.5
$region0: #{non_causal_self_attention.5}
  #allocation0 [shape = 'u32[]', space=smem, size = 0x4, offset = 0x4, fixed_abs, tag = 'smem constant byte address 0x4 - core index']
  #allocation1 [shape = 'u32[144,128]{1,0:T(1,128)}', space=vmem, size = 0x12000, scoped, tag = 'internal scratch']
  #allocation2 [shape = 'f32[16,32]{1,0:T(8,128)}', space=vmem, size = 0x2000, scoped, tag = 'scratch operand']
  %s0 = inlined_call_operand.vmem [shape: bf16[16,32], index: 0, kind: input, shape index: {}]
  %s1 = inlined_call_operand.vmem [shape: bf16[32,32], index: 1, kind: input, shape index: {}]
  %s2 = inlined_call_operand.vmem [shape: f32[1,32], index: 2, kind: input, shape index: {}]
  %s3 = inlined_call_operand.hbm [shape: f32[16,32], index: 3, kind: output, shape index: {}]
  %s4 = sld [smem:[#allocation0]]
  $region30: #{non_causal_self_attention.5} parent=0
    _
  %s6 = ssub.s32 1, %s4
  %s7 = scalar_select 0, %s6, %s4
  $region1: #{non_causal_self_attention.5} parent=0
    #allocation3 [shape = 'u8[8192]{0}', space=vmem, size = 0x2000, scoped, tag = 'output window, operand 0, single buffered']
    #allocation4 [shape = 's32[1]{0}', space=sflag, size = 0x4, scoped, tag = 'scoped memory for non_causal_self_attention.5']
    %8 = vsyncpa [#allocation4], 0
    // Predicated region
    $region2: #{non_causal_self_attention.5} parent=1 // pred_check
      _
    $region3: #{non_causal_self_attention.5} parent=1 // pred_check_branch
      %10 = sbr.rel (0) target = $region5
    $region4: #{non_causal_self_attention.5} parent=1 // pred_region
      _
    $region5: #{non_causal_self_attention.5} parent=1 // pred_fallthru
      _
    // Predicated region
    $region6: #{non_causal_self_attention.5} parent=1 // pred_check
      _
    $region7: #{non_causal_self_attention.5} parent=1 // pred_check_branch
      %12 = sbr.rel (0) target = $region9
    $region8: #{non_causal_self_attention.5} parent=1 // pred_region
      _
    $region9: #{non_causal_self_attention.5} parent=1 // pred_fallthru
      _
    // Predicated region
    $region10: #{non_causal_self_attention.5} parent=1 // pred_check
      _
    $region11: #{non_causal_self_attention.5} parent=1 // pred_check_branch
      %14 = sbr.rel (0) target = $region13
    $region12: #{non_causal_self_attention.5} parent=1 // pred_region
      _
    $region13: #{non_causal_self_attention.5} parent=1 // pred_fallthru
      _
    %p16 = scmp.eq.s32.totalorder 0, 0
    // Predicated region
    $region14: #{non_causal_self_attention.5} parent=1 // pred_check
      %p17 = pneg %p16
    $region15: #{non_causal_self_attention.5} parent=1 // pred_check_branch
      %19 = sbr.rel (%p17) target = $region17
    $region16: #{non_causal_self_attention.5} parent=1 // pred_region
      %vm20 = vcmask 261120
      %21 = vst.msk [vmem:[#allocation2] sm:$0xff] %vm20, 0.0
      %22 = vst.msk [vmem:[#allocation2 + $0x8] sm:$0xff] %vm20, 0.0
    $region17: #{non_causal_self_attention.5} parent=1 // pred_fallthru
      _
    %v23 = vld [vmem:[#allocation2] sm:$0xff]
    %v24 = vld [vmem:[#allocation2 + $0x8] sm:$0xff]
    %v25 = vld [vmem:[%s0] sm:$0xf]
    %v26 = vld [vmem:[%s0 + $0x4] sm:$0xf]
    %v27 = vld [vmem:[%s1] sm:$0xf]
    %v28 = vld [vmem:[%s1 + $0x4] sm:$0xf]
    %v29 = vld [vmem:[%s1 + $0x8] sm:$0xf]
    %v30 = vld [vmem:[%s1 + $0xc] sm:$0xf]
    %v33 = vunpack.c.l.b16 %v25
    %v34 = vunpack.c.l.b16 %v26
    %v35 = vpack.c.b16 %v34, %v33
    %v40 = vunpack.c.l.b16 %v27
    %v41 = vunpack.c.l.b16 %v28
    %v42 = vunpack.c.l.b16 %v29
    %v43 = vunpack.c.l.b16 %v30
    %v44 = vpack.c.b16 %v41, %v40
    %v45 = vpack.c.b16 %v43, %v42
    %vm48 = vcmask 261120
    %v50 = vsel %vm48, %v35, 0
    %52 = vmatprep.subr.bf16.mxu0 0
    %53 = vmatpush1.bf16.msra.mxu0 %v44
    %54 = vmatprep.subr.bf16.mxu0 0
    %55 = vmatpush1.bf16.msra.mxu0 %v45
    %56 = vmatprep.subr.bf16.mxu0 0
    %57 = vmatpush1.bf16.msra.mxu0 0
    %58 = vmatprep.subr.bf16.mxu0 0
    %59 = vmatpush1.bf16.msra.mxu0 0
    %60 = vmatprep.subr.bf16.mxu0 0
    %61 = vmatpush1.bf16.msra.mxu0 0
    %62 = vmatprep.subr.bf16.mxu0 0
    %63 = vmatpush1.bf16.msra.mxu0 0
    %64 = vmatprep.subr.bf16.mxu0 0
    %65 = vmatpush1.bf16.msra.mxu0 0
    %66 = vmatprep.subr.bf16.mxu0 0
    %67 = vmatpush1.bf16.msra.mxu0 0
    %68 = vmatprep.subr.bf16.mxu0 0
    %69 = vmatpush1.bf16.msra.mxu0 0
    %70 = vmatprep.subr.bf16.mxu0 0
    %71 = vmatpush1.bf16.msra.mxu0 0
    %72 = vmatprep.subr.bf16.mxu0 0
    %73 = vmatpush1.bf16.msra.mxu0 0
    %74 = vmatprep.subr.bf16.mxu0 0
    %75 = vmatpush1.bf16.msra.mxu0 0
    %76 = vmatprep.subr.bf16.mxu0 0
    %77 = vmatpush1.bf16.msra.mxu0 0
    %78 = vmatprep.subr.bf16.mxu0 0
    %79 = vmatpush1.bf16.msra.mxu0 0
    %80 = vmatprep.subr.bf16.mxu0 0
    %81 = vmatpush1.bf16.msra.mxu0 0
    %82 = vmatprep.subr.bf16.mxu0 0
    %83 = vmatpush1.bf16.msra.mxu0 0
    %84 = vmatprep.mubr.bf16.mxu0 0
    %85 = vmatmul.mubr.bf16.gmra.mrb[0].mxu0 %v50
    %v86 = vpop.f32.mrb[0].mxu0
    %v87 = vadd.f32 0.0, %v86
    %v88 = vpop.f32.mrb[0].mxu0
    %v89 = vpop.f32.mrb[0].mxu0
    %v90 = vadd.f32 0.0, %v89
    %v91 = vpop.f32.mrb[0].mxu0
    %92 = vdwg.mxu0
    %v93 = vadd.f32 %v23, %v87
    %v94 = vadd.f32 %v24, %v90
    %95 = vst.msk [vmem:[#allocation2] sm:$0xff] %vm48, %v93
    %96 = vst.msk [vmem:[#allocation2 + $0x8] sm:$0xff] %vm48, %v94
    // Predicated region
    $region18: #{non_causal_self_attention.5} parent=1 // pred_check
      %p97 = pneg %p16
    $region19: #{non_causal_self_attention.5} parent=1 // pred_check_branch
      %99 = sbr.rel (%p97) target = $region21
    $region20: #{non_causal_self_attention.5} parent=1 // pred_region
      %v100 = vld [vmem:[#allocation2] sm:$0xff]
      %v101 = vld [vmem:[#allocation2 + $0x8] sm:$0xff]
      %v102 = vld [vmem:[%s2] sm:$0x1]
      %v104 = vlaneseq
      %v105 = vshrl.u32 %v104, 7
      %v106 = vsub.s32 0, %v105
      %v107 = vrot.slane %v102, %v106
      %v109 = vadd.f32 %v100, %v107
      %v110 = vadd.f32 %v101, %v107
      %111 = vst.msk [vmem:[#allocation3] sm:$0xff] %vm48, %v109
      %112 = vst.msk [vmem:[#allocation3 + $0x8] sm:$0xff] %vm48, %v110
    $region21: #{non_causal_self_attention.5} parent=1 // pred_fallthru
      _
    // Predicated region
    $region22: #{non_causal_self_attention.5} parent=1 // pred_check
      _
    $region23: #{non_causal_self_attention.5} parent=1 // pred_check_branch
      %114 = sbr.rel (0) target = $region25
    $region24: #{non_causal_self_attention.5} parent=1 // pred_region
      %s116 = ssub.s32 256, 256
      %117 = vsyncadd [#allocation4], %s116
      %s118 = sshll.u32 [#allocation3], 4
      %s119 = int_to_ptr.vmem [resolvable:$true] %s118
      %124 = dma.vmem_to_hbm [thread:$0]  %s119, 256, %s3, [#allocation4], 128, 128, 8
    $region25: #{non_causal_self_attention.5} parent=1 // pred_fallthru
      _
    // Predicated region
    $region26: #{non_causal_self_attention.5} parent=1 // pred_check
      _
    $region27: #{non_causal_self_attention.5} parent=1 // pred_check_branch
      %126 = sbr.rel (0) target = $region29
    $region28: #{non_causal_self_attention.5} parent=1 // pred_region
      %127 = dma.done [#allocation4], 256
    $region29: #{non_causal_self_attention.5} parent=1 // pred_fallthru
      _
    %128 = vsyncpa [#allocation4], 1

// kernel: non_causal_self_attention.4
$region0: #{non_causal_self_attention.4}
  #allocation0 [shape = 'u32[]', space=smem, size = 0x4, offset = 0x4, fixed_abs, tag = 'smem constant byte address 0x4 - core index']
  #allocation1 [shape = 'u32[144,128]{1,0:T(1,128)}', space=vmem, size = 0x12000, scoped, tag = 'internal scratch']
  #allocation2 [shape = 'f32[8,1]{1,0:T(8,128)}', space=vmem, size = 0x1000, scoped, tag = 'scratch operand']
  #allocation3 [shape = 'f32[8,1]{1,0:T(8,128)}', space=vmem, size = 0x1000, scoped, tag = 'scratch operand']
  #allocation4 [shape = 'f32[8,16]{1,0:T(8,128)}', space=vmem, size = 0x1000, scoped, tag = 'scratch operand']
  %s0 = inlined_call_operand.vmem [shape: bf16[4,8,16], index: 0, kind: input, shape index: {}]
  %s1 = inlined_call_operand.vmem [shape: bf16[4,8,16], index: 1, kind: input, shape index: {}]
  %s2 = inlined_call_operand.vmem [shape: bf16[4,8,16], index: 2, kind: input, shape index: {}]
  %s3 = inlined_call_operand.vmem [shape: bf16[4,8,16], index: 3, kind: output, shape index: {}]
  %s4 = sld [smem:[#allocation0]]
  $region53: #{non_causal_self_attention.4} parent=0
    _
  %s6 = ssub.s32 1, %s4
  %s7 = scalar_select 0, %s6, %s4
  loop: start=0, step=1, limit=6
  $region2: #{non_causal_self_attention.4} parent=0 // loop_pre_header
    _
  $region3: #{non_causal_self_attention.4} parent=0 // loop_header
    %s9 = sphi 0, %s13
    %p10 = scmp.ge.s32.totalorder %s9, 6
    %s16 = sphi 0, %s35
    %s17 = sphi 0, %s31
    %s18 = sphi 0, %s27
    %s19 = sphi 0, %s16
    %s20 = sphi 0, %s17
    %s21 = sphi 0, %s18
    %s22 = sphi 0, %s19
    %s23 = sphi 0, %s20
    %s24 = sphi 0, %s21
    %s40 = sphi 0, %s42
    %s43 = sphi 0, %s40
    %s44 = sphi 0, %s43
    %s60 = sphi 0, %s44
    %s68 = sphi 0, %s70
    %s71 = sphi 0, %s68
    %s72 = sphi 0, %s71
    %s88 = sphi 0, %s72
    %s96 = sphi 0, %s98
    %s99 = sphi 0, %s96
    %s100 = sphi 0, %s99
    %s116 = sphi 0, %s100
    %s124 = sphi 0, %s126
    %s127 = sphi 0, %s124
    %s128 = sphi 0, %s127
    %s144 = sphi 0, %s128
  $region4: #{non_causal_self_attention.4} parent=0 // loop_header_branch
    %12 = sbr.rel (%p10) target = $region8
  $region5: #{non_causal_self_attention.4} parent=0 // loop_body
    %s14 = ssub.s32 %s9, 1
    %s15 = ssub.s32 %s9, 2
    %s25 = sadd.s32 1, %s18
    %p26 = scmp.ge.s32.totalorder %s25, 1
    %s27 = scalar_select %p26, 0, %s25
    %s28 = sadd.s32 1, %s17
    %s29 = scalar_select %p26, %s28, %s17
    %p30 = scmp.ge.s32.totalorder %s29, 1
    %s31 = scalar_select %p30, 0, %s29
    %s32 = sadd.s32 1, %s16
    %s33 = scalar_select %p30, %s32, %s16
    %p34 = scmp.ge.s32.totalorder %s33, 4
    %s35 = scalar_select %p34, 0, %s33
    %s36 = ssub.s32 %s16, %s35
    %s37 = ssub.s32 %s17, %s31
    %s38 = sor.u32 %s36, %s37
    %p39 = scmp.eq.s32.totalorder %s38, 0
    %s41 = sadd.s32 %s40, 1
    %s42 = scalar_select %p39, %s40, %s41
    %p45 = pneg %p39
    %p46 = scmp.eq.s32.totalorder %s9, 3
    %p47 = por %p45, %p46
    %p48 = scmp.ne.s32.totalorder %s40, %s43
    %p49 = scmp.eq.s32.totalorder %s9, 0
    %p50 = por %p48, %p49
    %p51 = scmp.ne.s32.totalorder %s40, %s43
    %p52 = scmp.eq.s32.totalorder %s14, 3
    %p53 = por %p51, %p52
    %p54 = scmp.ne.s32.totalorder %s43, %s44
    %p55 = scmp.eq.s32.totalorder %s14, 0
    %p56 = por %p54, %p55
    %p57 = scmp.ne.s32.totalorder %s43, %s44
    %p58 = scmp.eq.s32.totalorder %s15, 3
    %p59 = por %p57, %p58
    %p61 = scmp.ne.s32.totalorder %s44, %s60
    %p62 = scmp.eq.s32.totalorder %s15, 0
    %p63 = por %p61, %p62
    %s64 = ssub.s32 %s16, %s35
    %s65 = ssub.s32 %s18, %s27
    %s66 = sor.u32 %s64, %s65
    %p67 = scmp.eq.s32.totalorder %s66, 0
    %s69 = sadd.s32 %s68, 1
    %s70 = scalar_select %p67, %s68, %s69
    %p73 = pneg %p67
    %p74 = scmp.eq.s32.totalorder %s9, 3
    %p75 = por %p73, %p74
    %p76 = scmp.ne.s32.totalorder %s68, %s71
    %p77 = scmp.eq.s32.totalorder %s9, 0
    %p78 = por %p76, %p77
    %p79 = scmp.ne.s32.totalorder %s68, %s71
    %p80 = scmp.eq.s32.totalorder %s14, 3
    %p81 = por %p79, %p80
    %p82 = scmp.ne.s32.totalorder %s71, %s72
    %p83 = scmp.eq.s32.totalorder %s14, 0
    %p84 = por %p82, %p83
    %p85 = scmp.ne.s32.totalorder %s71, %s72
    %p86 = scmp.eq.s32.totalorder %s15, 3
    %p87 = por %p85, %p86
    %p89 = scmp.ne.s32.totalorder %s72, %s88
    %p90 = scmp.eq.s32.totalorder %s15, 0
    %p91 = por %p89, %p90
    %s92 = ssub.s32 %s16, %s35
    %s93 = ssub.s32 %s18, %s27
    %s94 = sor.u32 %s92, %s93
    %p95 = scmp.eq.s32.totalorder %s94, 0
    %s97 = sadd.s32 %s96, 1
    %s98 = scalar_select %p95, %s96, %s97
    %p101 = pneg %p95
    %p102 = scmp.eq.s32.totalorder %s9, 3
    %p103 = por %p101, %p102
    %p104 = scmp.ne.s32.totalorder %s96, %s99
    %p105 = scmp.eq.s32.totalorder %s9, 0
    %p106 = por %p104, %p105
    %p107 = scmp.ne.s32.totalorder %s96, %s99
    %p108 = scmp.eq.s32.totalorder %s14, 3
    %p109 = por %p107, %p108
    %p110 = scmp.ne.s32.totalorder %s99, %s100
    %p111 = scmp.eq.s32.totalorder %s14, 0
    %p112 = por %p110, %p111
    %p113 = scmp.ne.s32.totalorder %s99, %s100
    %p114 = scmp.eq.s32.totalorder %s15, 3
    %p115 = por %p113, %p114
    %p117 = scmp.ne.s32.totalorder %s100, %s116
    %p118 = scmp.eq.s32.totalorder %s15, 0
    %p119 = por %p117, %p118
    %s120 = ssub.s32 %s16, %s35
    %s121 = ssub.s32 %s17, %s31
    %s122 = sor.u32 %s120, %s121
    %p123 = scmp.eq.s32.totalorder %s122, 0
    %s125 = sadd.s32 %s124, 1
    %s126 = scalar_select %p123, %s124, %s125
    %p129 = pneg %p123
    %p130 = scmp.eq.s32.totalorder %s9, 3
    %p131 = por %p129, %p130
    %p132 = scmp.ne.s32.totalorder %s124, %s127
    %p133 = scmp.eq.s32.totalorder %s9, 0
    %p134 = por %p132, %p133
    %p135 = scmp.ne.s32.totalorder %s124, %s127
    %p136 = scmp.eq.s32.totalorder %s14, 3
    %p137 = por %p135, %p136
    %p138 = scmp.ne.s32.totalorder %s127, %s128
    %p139 = scmp.eq.s32.totalorder %s14, 0
    %p140 = por %p138, %p139
    %p141 = scmp.ne.s32.totalorder %s127, %s128
    %p142 = scmp.eq.s32.totalorder %s15, 3
    %p143 = por %p141, %p142
    %p145 = scmp.ne.s32.totalorder %s128, %s144
    %p146 = scmp.eq.s32.totalorder %s15, 0
    %p147 = por %p145, %p146
    %p148 = scmp.le.s32.totalorder 1, %s9
    %p149 = scmp.lt.s32.totalorder %s9, 5
    %p150 = pnand %p148, %p149
    %p151 = pneg %p150
    // Predicated region
    $region9: #{non_causal_self_attention.4} parent=5 // pred_check
      _
    $region10: #{non_causal_self_attention.4} parent=5 // pred_check_branch
      %153 = sbr.rel (%p150) target = $region12
    $region11: #{non_causal_self_attention.4} parent=5 // pred_region
      %s154 = ssub.s32 %s9, 1
    $region12: #{non_causal_self_attention.4} parent=5 // pred_fallthru
      _
    %p155 = scmp.lt.s32.totalorder %s9, 4
    // Predicated region
    $region13: #{non_causal_self_attention.4} parent=5 // pred_check
      %p156 = pneg %p155
    $region14: #{non_causal_self_attention.4} parent=5 // pred_check_branch
      %158 = sbr.rel (%p156) target = $region16
    $region15: #{non_causal_self_attention.4} parent=5 // pred_region
      // Predicated region
      $region17: #{non_causal_self_attention.4} parent=15 // pred_check
        %p159 = pneg %p50
      $region18: #{non_causal_self_attention.4} parent=15 // pred_check_branch
        %161 = sbr.rel (%p159) target = $region20
      $region19: #{non_causal_self_attention.4} parent=15 // pred_region
        %p162 = scmp.lt.s32.totalorder %s16, 3
        %s163 = scalar_select %p162, %s16, 3
        %p164 = scmp.lt.s32.totalorder %s17, 0
        %s165 = scalar_select %p164, %s17, 0
        %s166 = sadd.s32 %s165, %s163
        %s167 = smul.addr %s166, 4
        %s168 = scalar_lea.vmem %s0, %s167
      $region20: #{non_causal_self_attention.4} parent=15 // pred_fallthru
        _
      // Predicated region
      $region21: #{non_causal_self_attention.4} parent=15 // pred_check
        %p169 = pneg %p78
      $region22: #{non_causal_self_attention.4} parent=15 // pred_check_branch
        %171 = sbr.rel (%p169) target = $region24
      $region23: #{non_causal_self_attention.4} parent=15 // pred_region
        %p172 = scmp.lt.s32.totalorder %s16, 3
        %s173 = scalar_select %p172, %s16, 3
        %p174 = scmp.lt.s32.totalorder %s18, 0
        %s175 = scalar_select %p174, %s18, 0
        %s176 = sadd.s32 %s175, %s173
        %s177 = smul.addr %s176, 4
        %s178 = scalar_lea.vmem %s1, %s177
      $region24: #{non_causal_self_attention.4} parent=15 // pred_fallthru
        _
      // Predicated region
      $region25: #{non_causal_self_attention.4} parent=15 // pred_check
        %p179 = pneg %p106
      $region26: #{non_causal_self_attention.4} parent=15 // pred_check_branch
        %181 = sbr.rel (%p179) target = $region28
      $region27: #{non_causal_self_attention.4} parent=15 // pred_region
        %p182 = scmp.lt.s32.totalorder %s16, 3
        %s183 = scalar_select %p182, %s16, 3
        %p184 = scmp.lt.s32.totalorder %s18, 0
        %s185 = scalar_select %p184, %s18, 0
        %s186 = sadd.s32 %s185, %s183
        %s187 = smul.addr %s186, 4
        %s188 = scalar_lea.vmem %s2, %s187
      $region28: #{non_causal_self_attention.4} parent=15 // pred_fallthru
        _
    $region16: #{non_causal_self_attention.4} parent=5 // pred_fallthru
      _
    %p189 = scmp.le.s32.totalorder 1, %s9
    %p190 = scmp.lt.s32.totalorder %s9, 5
    %p191 = pnand %p189, %p190
    %p192 = pneg %p191
    // Predicated region
    $region29: #{non_causal_self_attention.4} parent=5 // pred_check
      _
    $region30: #{non_causal_self_attention.4} parent=5 // pred_check_branch
      %194 = sbr.rel (%p191) target = $region32
    $region31: #{non_causal_self_attention.4} parent=5 // pred_region
      %s195 = ssub.s32 %s9, 1
      %p196 = scmp.lt.s32.totalorder %s19, 3
      %s197 = scalar_select %p196, %s19, 3
      %p198 = scmp.lt.s32.totalorder %s20, 0
      %s199 = scalar_select %p198, %s20, 0
      %s200 = sadd.s32 %s199, %s197
      %s201 = smul.addr %s200, 4
      %s202 = scalar_lea.vmem %s0, %s201
      %p203 = pneg %p56
      %p204 = pneg %p53
      %p205 = scmp.lt.s32.totalorder %s19, 3
      %s206 = scalar_select %p205, %s19, 3
      %p207 = scmp.lt.s32.totalorder %s21, 0
      %s208 = scalar_select %p207, %s21, 0
      %s209 = sadd.s32 %s208, %s206
      %s210 = smul.addr %s209, 4
      %s211 = scalar_lea.vmem %s1, %s210
      %p212 = pneg %p84
      %p213 = pneg %p81
      %p214 = scmp.lt.s32.totalorder %s19, 3
      %s215 = scalar_select %p214, %s19, 3
      %p216 = scmp.lt.s32.totalorder %s21, 0
      %s217 = scalar_select %p216, %s21, 0
      %s218 = sadd.s32 %s217, %s215
      %s219 = smul.addr %s218, 4
      %s220 = scalar_lea.vmem %s2, %s219
      %p221 = pneg %p112
      %p222 = pneg %p109
      %p223 = pneg %p140
      %p224 = pneg %p137
      %p225 = scmp.lt.s32.totalorder %s19, 3
      %s226 = scalar_select %p225, %s19, 3
      %p227 = scmp.lt.s32.totalorder %s20, 0
      %s228 = scalar_select %p227, %s20, 0
      %s229 = sadd.s32 %s228, %s226
      %s230 = smul.addr %s229, 4
      %s231 = scalar_lea.vmem %s3, %s230
      %p232 = scmp.lt.s32.totalorder %s19, 3
      %s233 = scalar_select %p232, %s19, 3
      %p234 = scmp.lt.s32.totalorder %s20, 0
      %s235 = scalar_select %p234, %s20, 0
      %s236 = sadd.s32 %s235, %s233
      %s237 = smul.addr %s236, 4
      %s238 = scalar_lea.vmem %s0, %s237
      %p239 = scmp.lt.s32.totalorder %s19, 3
      %s240 = scalar_select %p239, %s19, 3
      %p241 = scmp.lt.s32.totalorder %s21, 0
      %s242 = scalar_select %p241, %s21, 0
      %s243 = sadd.s32 %s242, %s240
      %s244 = smul.addr %s243, 4
      %s245 = scalar_lea.vmem %s1, %s244
      %p246 = scmp.lt.s32.totalorder %s19, 3
      %s247 = scalar_select %p246, %s19, 3
      %p248 = scmp.lt.s32.totalorder %s21, 0
      %s249 = scalar_select %p248, %s21, 0
      %s250 = sadd.s32 %s249, %s247
      %s251 = smul.addr %s250, 4
      %s252 = scalar_lea.vmem %s2, %s251
      %p253 = scmp.lt.s32.totalorder %s19, 3
      %s254 = scalar_select %p253, %s19, 3
      %p255 = scmp.lt.s32.totalorder %s20, 0
      %s256 = scalar_select %p255, %s20, 0
      %s257 = sadd.s32 %s256, %s254
      %s258 = smul.addr %s257, 4
      %s259 = scalar_lea.vmem %s3, %s258
      %p261 = scmp.eq.s32.totalorder %s21, 0
      // Predicated region
      $region33: #{non_causal_self_attention.4} parent=31 // pred_check
        %p262 = pneg %p261
      $region34: #{non_causal_self_attention.4} parent=31 // pred_check_branch
        %264 = sbr.rel (%p262) target = $region36
      $region35: #{non_causal_self_attention.4} parent=31 // pred_region
        %vm265 = vcmask 7168
        %266 = vst.msk [vmem:[#allocation2] sm:$0xff] %vm265, -inf
        %267 = vst.msk [vmem:[#allocation3] sm:$0xff] %vm265, 0.0
        %vm268 = vcmask 130048
        %269 = vst.msk [vmem:[#allocation4] sm:$0xff] %vm268, 0.0
      $region36: #{non_causal_self_attention.4} parent=31 // pred_fallthru
        _
      %v270 = vld [vmem:[%s238] sm:$0xf]
      %v271 = vld [vmem:[%s245] sm:$0xf]
      %vm272 = vcmask 130048
      %v274 = vsel %vm272, %v270, 0
      %v277 = vsel %vm272, %v271, 0
      %279 = vmatprep.subr.bf16.mxu0 0
      %280 = vmatpush1.bf16.xpose.msra.mxu0 %v277
      %281 = vmatprep.subr.bf16.mxu0 0
      %282 = vmatpush1.bf16.xpose.msra.mxu0 0
      %283 = vmatprep.subr.bf16.mxu0 0
      %284 = vmatpush1.bf16.xpose.msra.mxu0 0
      %285 = vmatprep.subr.bf16.mxu0 0
      %286 = vmatpush1.bf16.xpose.msra.mxu0 0
      %287 = vmatprep.subr.bf16.mxu0 0
      %288 = vmatpush1.bf16.xpose.msra.mxu0 0
      %289 = vmatprep.subr.bf16.mxu0 0
      %290 = vmatpush1.bf16.xpose.msra.mxu0 0
      %291 = vmatprep.subr.bf16.mxu0 0
      %292 = vmatpush1.bf16.xpose.msra.mxu0 0
      %293 = vmatprep.subr.bf16.mxu0 0
      %294 = vmatpush1.bf16.xpose.msra.mxu0 0
      %295 = vmatprep.subr.bf16.mxu0 0
      %296 = vmatpush1.bf16.xpose.msra.mxu0 0
      %297 = vmatprep.subr.bf16.mxu0 0
      %298 = vmatpush1.bf16.xpose.msra.mxu0 0
      %299 = vmatprep.subr.bf16.mxu0 0
      %300 = vmatpush1.bf16.xpose.msra.mxu0 0
      %301 = vmatprep.subr.bf16.mxu0 0
      %302 = vmatpush1.bf16.xpose.msra.mxu0 0
      %303 = vmatprep.subr.bf16.mxu0 0
      %304 = vmatpush1.bf16.xpose.msra.mxu0 0
      %305 = vmatprep.subr.bf16.mxu0 0
      %306 = vmatpush1.bf16.xpose.msra.mxu0 0
      %307 = vmatprep.subr.bf16.mxu0 0
      %308 = vmatpush1.bf16.xpose.msra.mxu0 0
      %309 = vmatprep.subr.bf16.mxu0 0
      %310 = vmatpush1.bf16.xpose.msra.mxu0 0
      %311 = vmatprep.mubr.bf16.mxu0 0
      %312 = vmatmul.mubr.bf16.gmra.mrb[0].mxu0 %v274
      %v313 = vpop.f32.mrb[0].mxu0
      %v314 = vadd.f32 0.0, %v313
      %v315 = vpop.f32.mrb[0].mxu0
      %v316 = vpop.f32.mrb[0].mxu0
      %v317 = vpop.f32.mrb[0].mxu0
      %318 = vdwg.mxu0
      %v319 = vmul.f32 %v314, 0.25
      %v320 = vld [vmem:[#allocation2] sm:$0xff]
      %vm321 = vcmask 64512
      %v322 = vsel %vm321, %v319, -inf
      %323 = vmax.xlane.f32.xlu0 %v322
      %v324 = vpop.xlane.xlu0 %323
      %v325 = vmax.f32 %v320, %v324
      %v326 = vsub.f32 %v320, %v325
      %v327 = vmul.f32 %v326, 1.442695
      %v328 = vpow.pop %v327
      %330 = vset.pattern.permute.xlu0 0
      %331 = vperm.xlu0 %330, %v325
      %v332 = vpop.permute.xlu0 %331
      %v334 = vsub.f32 %v319, %v332
      %v335 = vmul.f32 %v334, 1.442695
      %v336 = vpow.pop %v335
      %v337 = vld [vmem:[#allocation3] sm:$0xff]
      %v338 = vmul.f32 %v328, %v337
      %v339 = vsel %vm321, %v336, 0.0
      %340 = vadd.xlane.f32.xlu0 %v339
      %v341 = vpop.xlane.xlu0 %340
      %v342 = vadd.f32 %v338, %v341
      %vm343 = vcmask 7168
      %344 = vst.msk [vmem:[#allocation3] sm:$0xff] %vm343, %v342
      %v345 = vld [vmem:[#allocation4] sm:$0xff]
      %347 = vset.pattern.permute.xlu0 0
      %348 = vperm.xlu0 %347, %v328
      %v349 = vpop.permute.xlu0 %348
      %v351 = vmul.f32 %v349, %v345
      %v352 = vpack.c.bf16 %v336, %v336
      %v353 = vld [vmem:[%s252] sm:$0xf]
      %v355 = vsel %vm321, %v352, 0
      %vm357 = vcmask 1043456
      %v359 = vsel %vm357, %v353, 0
      %361 = vmatprep.subr.bf16.mxu0 0
      %362 = vmatpush1.bf16.msra.mxu0 %v359
      %363 = vmatprep.subr.bf16.mxu0 0
      %364 = vmatpush1.bf16.msra.mxu0 0
      %365 = vmatprep.subr.bf16.mxu0 0
      %366 = vmatpush1.bf16.msra.mxu0 0
      %367 = vmatprep.subr.bf16.mxu0 0
      %368 = vmatpush1.bf16.msra.mxu0 0
      %369 = vmatprep.subr.bf16.mxu0 0
      %370 = vmatpush1.bf16.msra.mxu0 0
      %371 = vmatprep.subr.bf16.mxu0 0
      %372 = vmatpush1.bf16.msra.mxu0 0
      %373 = vmatprep.subr.bf16.mxu0 0
      %374 = vmatpush1.bf16.msra.mxu0 0
      %375 = vmatprep.subr.bf16.mxu0 0
      %376 = vmatpush1.bf16.msra.mxu0 0
      %377 = vmatprep.subr.bf16.mxu0 0
      %378 = vmatpush1.bf16.msra.mxu0 0
      %379 = vmatprep.subr.bf16.mxu0 0
      %380 = vmatpush1.bf16.msra.mxu0 0
      %381 = vmatprep.subr.bf16.mxu0 0
      %382 = vmatpush1.bf16.msra.mxu0 0
      %383 = vmatprep.subr.bf16.mxu0 0
      %384 = vmatpush1.bf16.msra.mxu0 0
      %385 = vmatprep.subr.bf16.mxu0 0
      %386 = vmatpush1.bf16.msra.mxu0 0
      %387 = vmatprep.subr.bf16.mxu0 0
      %388 = vmatpush1.bf16.msra.mxu0 0
      %389 = vmatprep.subr.bf16.mxu0 0
      %390 = vmatpush1.bf16.msra.mxu0 0
      %391 = vmatprep.subr.bf16.mxu0 0
      %392 = vmatpush1.bf16.msra.mxu0 0
      %393 = vmatprep.mubr.bf16.mxu0 0
      %394 = vmatmul.mubr.bf16.gmra.mrb[0].mxu0 %v355
      %v395 = vpop.f32.mrb[0].mxu0
      %v396 = vadd.f32 0.0, %v395
      %v397 = vpop.f32.mrb[0].mxu0
      %v398 = vpop.f32.mrb[0].mxu0
      %v399 = vpop.f32.mrb[0].mxu0
      %400 = vdwg.mxu0
      %v401 = vadd.f32 %v351, %v396
      %402 = vst.msk [vmem:[#allocation4] sm:$0xff] %vm272, %v401
      %403 = vst.msk [vmem:[#allocation2] sm:$0xff] %vm343, %v325
      // Predicated region
      $region37: #{non_causal_self_attention.4} parent=31 // pred_check
        %p404 = pneg %p261
      $region38: #{non_causal_self_attention.4} parent=31 // pred_check_branch
        %406 = sbr.rel (%p404) target = $region40
      $region39: #{non_causal_self_attention.4} parent=31 // pred_region
        %v407 = vld [vmem:[#allocation3] sm:$0xff]
        %v408 = vrcp.pop %v407
        %v409 = vld [vmem:[#allocation4] sm:$0xff]
        %411 = vset.pattern.permute.xlu0 0
        %412 = vperm.xlu0 %411, %v408
        %v413 = vpop.permute.xlu0 %412
        %v415 = vmul.f32 %v409, %v413
        %v416 = vpack.c.bf16 %v415, %v415
        %vm417 = vcmask 125952
        %418 = vst.msk [vmem:[%s259] sm:$0xf] %vm417, %v416
      $region40: #{non_causal_self_attention.4} parent=31 // pred_fallthru
        _
      %p419 = scmp.lt.s32.totalorder %s19, 3
      %s420 = scalar_select %p419, %s19, 3
      %p421 = scmp.lt.s32.totalorder %s20, 0
      %s422 = scalar_select %p421, %s20, 0
      %s423 = sadd.s32 %s422, %s420
      %s424 = smul.addr %s423, 4
      %s425 = scalar_lea.vmem %s3, %s424
      // Predicated region
      $region41: #{non_causal_self_attention.4} parent=31 // pred_check
        %p426 = pneg %p137
      $region42: #{non_causal_self_attention.4} parent=31 // pred_check_branch
        %428 = sbr.rel (%p426) target = $region44
      $region43: #{non_causal_self_attention.4} parent=31 // pred_region
        _
      $region44: #{non_causal_self_attention.4} parent=31 // pred_fallthru
        _
    $region32: #{non_causal_self_attention.4} parent=5 // pred_fallthru
      _
    %p429 = scmp.le.s32.totalorder 2, %s9
    // Predicated region
    $region45: #{non_causal_self_attention.4} parent=5 // pred_check
      %p430 = pneg %p429
    $region46: #{non_causal_self_attention.4} parent=5 // pred_check_branch
      %432 = sbr.rel (%p430) target = $region48
    $region47: #{non_causal_self_attention.4} parent=5 // pred_region
      %s433 = ssub.s32 %s9, 2
      // Predicated region
      $region49: #{non_causal_self_attention.4} parent=47 // pred_check
        %p434 = pneg %p143
      $region50: #{non_causal_self_attention.4} parent=47 // pred_check_branch
        %436 = sbr.rel (%p434) target = $region52
      $region51: #{non_causal_self_attention.4} parent=47 // pred_region
        %p437 = scmp.lt.s32.totalorder %s22, 3
        %s438 = scalar_select %p437, %s22, 3
        %p439 = scmp.lt.s32.totalorder %s23, 0
        %s440 = scalar_select %p439, %s23, 0
        %s441 = sadd.s32 %s440, %s438
        %s442 = smul.addr %s441, 4
        %s443 = scalar_lea.vmem %s3, %s442
      $region52: #{non_causal_self_attention.4} parent=47 // pred_fallthru
        _
    $region48: #{non_causal_self_attention.4} parent=5 // pred_fallthru
      _
  $region6: #{non_causal_self_attention.4} parent=0 // loop_footer
    %s13 = sadd.s32 1, %s9
  $region7: #{non_causal_self_attention.4} parent=0 // loop_footer_branch
    %8 = sbr.rel target = $region3
  $region8: #{non_causal_self_attention.4} parent=0 // loop_exit
    _

</llo_original>
